<compile_context>
chip_gen: v5e
topology: v5e:2x2
jax: 0.10.0
libtpu: 0.0.40
codegen_flags: <defaults>
</compile_context>

<pallas_src>
import jax
import jax.numpy as jnp
import numpy as np
from jax.experimental import pallas as pl
from jax.experimental.pallas import tpu as pltpu

N_FEAT = 4        # node_features
HIDDEN = 64       # DCRNN out_channels
K = 3             # diffusion filter size
N_OUT = 4         # final Linear(64, 4)
OUT_LANES = 128   # lane-padded output width (sliced back to N_OUT in the wrapper)


def _recurrent_gcn_kernel(mask_ref, x_ref, inv_ref, wg_ref, wl_ref, out_ref):
    f32 = jnp.float32
    bf16 = jnp.bfloat16
    n = x_ref.shape[0]
    f = x_ref.shape[1]

    M = mask_ref[...]                  # (2N, N) bf16: rows [0,N)=mask^T (out), [N,2N)=mask (in)
    X = x_ref[...]                     # (N, F) f32
    inv = inv_ref[...]                 # (N, 2) f32 exact inverse degrees (0 for isolated nodes)
    inv_out = inv[:, 0:1]              # (N, 1)
    inv_in = inv[:, 1:2]               # (N, 1)

    # ---- diffusion taps, K = 3, both directions fused into 2 MXU pushes ----
    # T1: [mask^T; mask] @ [X*inv_out | X*inv_in]  ->  T1o = top-left, T1i = bottom-right.
    rhs1 = jnp.concatenate([X * inv_out, X * inv_in], axis=1).astype(bf16)   # (N, 2F)
    t1 = jnp.dot(M, rhs1, preferred_element_type=f32)                        # (2N, 2F)
    T1o = t1[:n, :f]
    T1i = t1[n:, f:]

    # T2 = 2 * P(T1) - X (Chebyshev recursion), again both directions in one matmul.
    rhs2 = jnp.concatenate([T1o * inv_out, T1i * inv_in], axis=1).astype(bf16)
    t2 = jnp.dot(M, rhs2, preferred_element_type=f32)
    T2o = 2.0 * t2[:n, :f] - X
    T2i = 2.0 * t2[n:, f:] - X

    # Tap slab + ones column (biases folded into the last weight row).  The k=0 tap
    # is shared between directions (its two weight blocks were pre-summed).
    ones = jnp.ones((n, 1), f32)
    taps = jnp.concatenate([X, T1o, T2o, T1i, T2i, ones], axis=1).astype(bf16)  # (N, 5F+1)

    # One fused weight matmul -> both live gates' pre-activations (Z | candidate).
    pre = jnp.dot(taps, wg_ref[...], preferred_element_type=f32)   # (N, 2*HIDDEN)
    Z = jax.nn.sigmoid(pre[:, :HIDDEN])
    H_tilde = jnp.tanh(pre[:, HIDDEN:])
    h = jnp.maximum((1.0 - Z) * H_tilde, 0.0)     # GRU update with H0 == 0, then ReLU

    # Lane-dense (128-wide, zero-padded) final Linear with its bias folded in.
    h_ext = jnp.concatenate([h, ones], axis=1).astype(bf16)        # (N, HIDDEN+1)
    out_ref[...] = jnp.dot(h_ext, wl_ref[...], preferred_element_type=f32)


def recurrent_gcn_forward(x, edge_index, edge_weight, params):
    n = x.shape[0]
    src, dst = edge_index[0], edge_index[1]
    w = edge_weight.astype(jnp.float32)

    # Densify the graph once outside the kernel.  Only a bf16 0/1 mask (exact in
    # bf16) enters the kernel; degree normalization uses exact f32 division here.
    A = jnp.zeros((n, n), jnp.float32).at[src, dst].set(w)
    mask = (A != 0.0).astype(jnp.bfloat16)                       # (N, N)
    mask_big = jnp.concatenate([mask.T, mask], axis=0)           # (2N, N): out dir, then in dir
    deg_out = jnp.sum(A, axis=1)                                 # weighted out-degree
    deg_in = jnp.sum(A, axis=0)                                  # weighted in-degree
    inv_out = jnp.where(deg_out != 0.0,
                        1.0 / jnp.where(deg_out != 0.0, deg_out, 1.0), 0.0)
    inv_in = jnp.where(deg_in != 0.0,
                       1.0 / jnp.where(deg_in != 0.0, deg_in, 1.0), 0.0)
    inv_deg = jnp.stack([inv_out, inv_in], axis=1)               # (N, 2) f32

    # Fused gate weights: X-block only (H0 == 0), k=0 tap deduplicated across the
    # two directions, bias folded in as the last row; Z gate | candidate side by side.
    def gate_slab(w_full, bias):                                 # (2, K, in_ch, H), (1, H)
        wx = w_full[:, :, :N_FEAT, :]                            # (2, K, F, H)
        return jnp.concatenate(
            [wx[0, 0] + wx[1, 0],                                # shared k=0 (X) tap
             wx[0, 1], wx[0, 2],                                 # out-direction T1, T2
             wx[1, 1], wx[1, 2],                                 # in-direction  T1, T2
             bias], axis=0)                                      # (5F+1, H)

    w_gate = jnp.concatenate([gate_slab(params["wz"], params["bz"]),
                              gate_slab(params["wh"], params["bh"])],
                             axis=1).astype(jnp.bfloat16)        # (5F+1, 2H) = (21, 128)

    # Final Linear zero-padded to 128 output lanes (unmasked lane-dense store),
    # bias folded into the last row.
    w_lin = (jnp.zeros((HIDDEN + 1, OUT_LANES), jnp.float32)
             .at[:HIDDEN, :N_OUT].set(params["w_lin"])
             .at[HIDDEN, :N_OUT].set(params["b_lin"][0])).astype(jnp.bfloat16)

    inputs = (mask_big, x.astype(jnp.float32), inv_deg, w_gate, w_lin)
    vmem = pl.BlockSpec(memory_space=pltpu.MemorySpace.VMEM)
    out = pl.pallas_call(
        _recurrent_gcn_kernel,
        out_shape=jax.ShapeDtypeStruct((n, OUT_LANES), jnp.float32),
        in_specs=[vmem] * len(inputs),
        out_specs=vmem,
        compiler_params=pltpu.CompilerParams(vmem_limit_bytes=32 * 1024 * 1024),
    )(*inputs)
    return out[:, :N_OUT]


def init_params(key):
    ks = jax.random.split(key, 5)

    def glorot(k, shape):
        fan_in, fan_out = shape[-2], shape[-1]
        lim = float(np.sqrt(6.0 / (fan_in + fan_out)))
        return jax.random.uniform(k, shape, jnp.float32, -lim, lim)

    in_ch = N_FEAT + HIDDEN
    zeros_h = jnp.zeros((1, HIDDEN), jnp.float32)             # DConv bias init = zeros
    return dict(
        wz=glorot(ks[0], (2, K, in_ch, HIDDEN)), bz=zeros_h,
        wr=glorot(ks[1], (2, K, in_ch, HIDDEN)), br=zeros_h,  # R gate (dead when H0==0)
        wh=glorot(ks[2], (2, K, in_ch, HIDDEN)), bh=zeros_h,
        w_lin=glorot(ks[3], (HIDDEN, N_OUT)),                 # stored (in,out): y = h@W + b
        b_lin=jax.random.uniform(ks[4], (1, N_OUT), jnp.float32, -0.1, 0.1))


def reference_forward(x, edge_index, edge_weight, params):
    # Pure-JAX mirror of the FULL GRU-style DCRNN cell (including the R gate and all
    # H-block weights) starting from H0 == 0, in f32 HIGHEST precision.  The Pallas
    # kernel's H0 == 0 specialization must match this up to bf16-operand tolerance.
    hp = jax.lax.Precision.HIGHEST
    n = x.shape[0]
    src, dst = edge_index[0], edge_index[1]
    A = jnp.zeros((n, n), jnp.float32).at[src, dst].set(edge_weight.astype(jnp.float32))
    mask = (A != 0.0).astype(jnp.float32)
    deg_out = A.sum(1, keepdims=True)
    deg_in = A.sum(0, keepdims=True)
    M_o = jnp.where(deg_out != 0.0, mask / deg_out, 0.0).T
    M_i = jnp.where(deg_in != 0.0, mask / deg_in, 0.0)
    H0 = jnp.zeros((n, HIDDEN), jnp.float32)
    X = x.astype(jnp.float32)

    def taps(V):
        T1o = jnp.dot(M_o, V, precision=hp)
        T1i = jnp.dot(M_i, V, precision=hp)
        T2o = 2.0 * jnp.dot(M_o, T1o, precision=hp) - V
        T2i = 2.0 * jnp.dot(M_i, T1i, precision=hp) - V
        return (V, T1o, T2o, V, T1i, T2i)

    tx = taps(X)

    def dconv(h_in, w, b):
        th = taps(h_in)
        wx = w[:, :, :N_FEAT, :].reshape(2 * K, N_FEAT, HIDDEN)
        wh = w[:, :, N_FEAT:, :].reshape(2 * K, HIDDEN, HIDDEN)
        acc = jnp.zeros((n, HIDDEN), jnp.float32)
        for k in range(2 * K):
            acc = acc + jnp.dot(tx[k], wx[k], precision=hp)
            acc = acc + jnp.dot(th[k], wh[k], precision=hp)
        return acc + b

    Z = jax.nn.sigmoid(dconv(H0, params["wz"], params["bz"]))
    R = jax.nn.sigmoid(dconv(H0, params["wr"], params["br"]))
    Ht = jnp.tanh(dconv(H0 * R, params["wh"], params["bh"]))
    H = Z * H0 + (1.0 - Z) * Ht
    h = jnp.maximum(H, 0.0)
    return jnp.dot(h, params["w_lin"], precision=hp) + params["b_lin"]


if __name__ == "__main__":
    key = jax.random.PRNGKey(0)
    k_par, k_x, k_w = jax.random.split(key, 3)

    n_nodes = 16
    params = init_params(k_par)

    # Node features (N, node_features)
    x = jax.random.normal(k_x, (n_nodes, N_FEAT), jnp.float32)

    # Directed ring + skip-3 graph (every node has positive in/out degree).
    idx = jnp.arange(n_nodes)
    src = jnp.concatenate([idx, idx])
    dst = jnp.concatenate([(idx + 1) % n_nodes, (idx + 3) % n_nodes])
    edge_index = jnp.stack([src, dst]).astype(jnp.int32)          # (2, 2N)
    edge_weight = jax.random.uniform(k_w, (2 * n_nodes,), jnp.float32, 0.5, 1.5)

    out = jax.block_until_ready(
        recurrent_gcn_forward(x, edge_index, edge_weight, params))
    ref = jax.block_until_ready(
        reference_forward(x, edge_index, edge_weight, params))

    assert out.shape == (n_nodes, N_OUT)
    assert bool(jnp.all(jnp.isfinite(out)))
    max_err = float(jnp.max(jnp.abs(out - ref)))
    # Remaining error is purely from bf16 MXU operands (degrees now use exact f32
    # division in the wrapper; no approx reciprocal anywhere).
    if max_err > 5e-2:
        raise RuntimeError(f"kernel/reference mismatch: {max_err}")

    print("KERNEL_OK")
</pallas_src>

<mosaic_0001>
module attributes {stable_mosaic.version = 11 : i64} {
  func.func @_recurrent_gcn_kernel(%arg0: memref<32x16xbf16, #tpu.memory_space<vmem>>, %arg1: memref<16x4xf32, #tpu.memory_space<vmem>>, %arg2: memref<16x2xf32, #tpu.memory_space<vmem>>, %arg3: memref<21x128xbf16, #tpu.memory_space<vmem>>, %arg4: memref<65x128xbf16, #tpu.memory_space<vmem>>, %arg5: memref<16x128xf32, #tpu.memory_space<vmem>>) attributes {dimension_semantics = [], scalar_prefetch = 0 : i64, scratch_operands = 0 : i64, tpu.core_type = #tpu.core_type<tc>} {
    %c0 = arith.constant 0 : index
    %c0_0 = arith.constant 0 : index
    %0 = vector.load %arg0[%c0, %c0_0] : memref<32x16xbf16, #tpu.memory_space<vmem>>, vector<32x16xbf16>
    %c0_1 = arith.constant 0 : index
    %c0_2 = arith.constant 0 : index
    %1 = vector.load %arg1[%c0_1, %c0_2] : memref<16x4xf32, #tpu.memory_space<vmem>>, vector<16x4xf32>
    %c0_3 = arith.constant 0 : index
    %c0_4 = arith.constant 0 : index
    %2 = vector.load %arg2[%c0_3, %c0_4] : memref<16x2xf32, #tpu.memory_space<vmem>>, vector<16x2xf32>
    %3 = vector.extract_strided_slice %2 {offsets = [0, 0], sizes = [16, 1], strides = [1, 1]} : vector<16x2xf32> to vector<16x1xf32>
    %4 = vector.extract_strided_slice %2 {offsets = [0, 1], sizes = [16, 1], strides = [1, 1]} : vector<16x2xf32> to vector<16x1xf32>
    %5 = vector.broadcast %3 : vector<16x1xf32> to vector<16x4xf32>
    %6 = arith.mulf %1, %5 : vector<16x4xf32>
    %7 = vector.broadcast %4 : vector<16x1xf32> to vector<16x4xf32>
    %8 = arith.mulf %1, %7 : vector<16x4xf32>
    %9 = tpu.concatenate %6, %8 in 1 : vector<16x4xf32>, vector<16x4xf32> -> vector<16x8xf32>
    %10 = arith.truncf %9 : vector<16x8xf32> to vector<16x8xbf16>
    %cst = arith.constant dense<0.000000e+00> : vector<32x8xf32>
    %11 = tpu.matmul %0, %10, %cst {dimension_numbers = #tpu.dot_dimension_numbers<[1], [0], [0], [1], [0, 0, 1, 1], [], []>} : vector<32x16xbf16>, vector<16x8xbf16>, vector<32x8xf32> -> vector<32x8xf32>
    %12 = vector.extract_strided_slice %11 {offsets = [0, 0], sizes = [16, 4], strides = [1, 1]} : vector<32x8xf32> to vector<16x4xf32>
    %13 = vector.extract_strided_slice %11 {offsets = [16, 4], sizes = [16, 4], strides = [1, 1]} : vector<32x8xf32> to vector<16x4xf32>
    %14 = vector.broadcast %3 : vector<16x1xf32> to vector<16x4xf32>
    %15 = arith.mulf %12, %14 : vector<16x4xf32>
    %16 = vector.broadcast %4 : vector<16x1xf32> to vector<16x4xf32>
    %17 = arith.mulf %13, %16 : vector<16x4xf32>
    %18 = tpu.concatenate %15, %17 in 1 : vector<16x4xf32>, vector<16x4xf32> -> vector<16x8xf32>
    %19 = arith.truncf %18 : vector<16x8xf32> to vector<16x8xbf16>
    %cst_5 = arith.constant dense<0.000000e+00> : vector<32x8xf32>
    %20 = tpu.matmul %0, %19, %cst_5 {dimension_numbers = #tpu.dot_dimension_numbers<[1], [0], [0], [1], [0, 0, 1, 1], [], []>} : vector<32x16xbf16>, vector<16x8xbf16>, vector<32x8xf32> -> vector<32x8xf32>
    %21 = vector.extract_strided_slice %20 {offsets = [0, 0], sizes = [16, 4], strides = [1, 1]} : vector<32x8xf32> to vector<16x4xf32>
    %cst_6 = arith.constant 2.000000e+00 : f32
    %22 = vector.broadcast %cst_6 : f32 to vector<16x4xf32>
    %23 = arith.mulf %22, %21 : vector<16x4xf32>
    %24 = arith.subf %23, %1 : vector<16x4xf32>
    %25 = vector.extract_strided_slice %20 {offsets = [16, 4], sizes = [16, 4], strides = [1, 1]} : vector<32x8xf32> to vector<16x4xf32>
    %cst_7 = arith.constant 2.000000e+00 : f32
    %26 = vector.broadcast %cst_7 : f32 to vector<16x4xf32>
    %27 = arith.mulf %26, %25 : vector<16x4xf32>
    %28 = arith.subf %27, %1 : vector<16x4xf32>
    %cst_8 = arith.constant 1.000000e+00 : f32
    %29 = vector.broadcast %cst_8 : f32 to vector<16x1xf32>
    %30 = tpu.concatenate %1, %12, %24, %13, %28, %29 in 1 : vector<16x4xf32>, vector<16x4xf32>, vector<16x4xf32>, vector<16x4xf32>, vector<16x4xf32>, vector<16x1xf32> -> vector<16x21xf32>
    %31 = arith.truncf %30 : vector<16x21xf32> to vector<16x21xbf16>
    %c0_9 = arith.constant 0 : index
    %c0_10 = arith.constant 0 : index
    %32 = vector.load %arg3[%c0_9, %c0_10] : memref<21x128xbf16, #tpu.memory_space<vmem>>, vector<21x128xbf16>
    %cst_11 = arith.constant dense<0.000000e+00> : vector<16x128xf32>
    %33 = tpu.matmul %31, %32, %cst_11 {dimension_numbers = #tpu.dot_dimension_numbers<[1], [0], [0], [1], [0, 0, 1, 1], [], []>} : vector<16x21xbf16>, vector<21x128xbf16>, vector<16x128xf32> -> vector<16x128xf32>
    %34 = vector.extract_strided_slice %33 {offsets = [0, 0], sizes = [16, 64], strides = [1, 1]} : vector<16x128xf32> to vector<16x64xf32>
    %35 = arith.negf %34 : vector<16x64xf32>
    %36 = math.exp %35 : vector<16x64xf32>
    %cst_12 = arith.constant 1.000000e+00 : f32
    %37 = vector.broadcast %cst_12 : f32 to vector<16x64xf32>
    %38 = arith.addf %37, %36 : vector<16x64xf32>
    %39 = arith.divf %37, %38 : vector<16x64xf32>
    %40 = vector.extract_strided_slice %33 {offsets = [0, 64], sizes = [16, 64], strides = [1, 1]} : vector<16x128xf32> to vector<16x64xf32>
    %41 = math.tanh %40 : vector<16x64xf32>
    %cst_13 = arith.constant 1.000000e+00 : f32
    %42 = vector.broadcast %cst_13 : f32 to vector<16x64xf32>
    %43 = arith.subf %42, %39 : vector<16x64xf32>
    %44 = arith.mulf %43, %41 : vector<16x64xf32>
    %cst_14 = arith.constant 0.000000e+00 : f32
    %45 = vector.broadcast %cst_14 : f32 to vector<16x64xf32>
    %46 = arith.maximumf %44, %45 : vector<16x64xf32>
    %47 = tpu.concatenate %46, %29 in 1 : vector<16x64xf32>, vector<16x1xf32> -> vector<16x65xf32>
    %48 = arith.truncf %47 : vector<16x65xf32> to vector<16x65xbf16>
    %c0_15 = arith.constant 0 : index
    %c0_16 = arith.constant 0 : index
    %49 = vector.load %arg4[%c0_15, %c0_16] : memref<65x128xbf16, #tpu.memory_space<vmem>>, vector<65x128xbf16>
    %cst_17 = arith.constant dense<0.000000e+00> : vector<16x128xf32>
    %50 = tpu.matmul %48, %49, %cst_17 {dimension_numbers = #tpu.dot_dimension_numbers<[1], [0], [0], [1], [0, 0, 1, 1], [], []>} : vector<16x65xbf16>, vector<65x128xbf16>, vector<16x128xf32> -> vector<16x128xf32>
    %c0_18 = arith.constant 0 : index
    %c0_19 = arith.constant 0 : index
    %51 = vector.load %arg5[%c0_18, %c0_19] : memref<16x128xf32, #tpu.memory_space<vmem>>, vector<16x128xf32>
    tpu.vector_store %arg5[%c0_18, %c0_19], %50 {strides = array<i32>} : memref<16x128xf32, #tpu.memory_space<vmem>>, vector<16x128xf32>,
    return
  }
}

</mosaic_0001>

<llo_original>
// kernel: tpu_custom_call.1
$region0: #{tpu_custom_call.1}
  #allocation0 [shape = 'u32[]', space=smem, size = 0x4, offset = 0x4, fixed_abs, tag = 'smem constant byte address 0x4 - core index']
  #allocation1 [shape = 'u32[72,128]{1,0:T(1,128)}', space=vmem, size = 0x9000, scoped, tag = 'internal scratch']
  %s0 = inlined_call_operand.vmem [shape: bf16[32,16], index: 0, kind: input, shape index: {}]
  %s1 = inlined_call_operand.vmem [shape: f32[16,4], index: 1, kind: input, shape index: {}]
  %s2 = inlined_call_operand.vmem [shape: f32[16,2], index: 2, kind: input, shape index: {}]
  %s3 = inlined_call_operand.vmem [shape: bf16[21,128], index: 3, kind: input, shape index: {}]
  %s4 = inlined_call_operand.vmem [shape: bf16[65,128], index: 4, kind: input, shape index: {}]
  %s5 = inlined_call_operand.hbm [shape: f32[16,128], index: 5, kind: output, shape index: {}]
  %s6 = sld [smem:[#allocation0]]
  $region30: #{tpu_custom_call.1} parent=0
    _
  %s8 = ssub.s32 1, %s6
  %s9 = scalar_select 0, %s8, %s6
  $region1: #{tpu_custom_call.1} parent=0
    #allocation2 [shape = 'u8[8192]{0}', space=vmem, size = 0x2000, scoped, tag = 'output window, operand 0, single buffered']
    #allocation3 [shape = 's32[1]{0}', space=sflag, size = 0x4, scoped, tag = 'scoped memory for tpu_custom_call.1']
    %10 = vsyncpa [#allocation3], 0
    // Predicated region
    $region2: #{tpu_custom_call.1} parent=1 // pred_check
      _
    $region3: #{tpu_custom_call.1} parent=1 // pred_check_branch
      %12 = sbr.rel (0) target = $region5
    $region4: #{tpu_custom_call.1} parent=1 // pred_region
      _
    $region5: #{tpu_custom_call.1} parent=1 // pred_fallthru
      _
    // Predicated region
    $region6: #{tpu_custom_call.1} parent=1 // pred_check
      _
    $region7: #{tpu_custom_call.1} parent=1 // pred_check_branch
      %14 = sbr.rel (0) target = $region9
    $region8: #{tpu_custom_call.1} parent=1 // pred_region
      _
    $region9: #{tpu_custom_call.1} parent=1 // pred_fallthru
      _
    // Predicated region
    $region10: #{tpu_custom_call.1} parent=1 // pred_check
      _
    $region11: #{tpu_custom_call.1} parent=1 // pred_check_branch
      %16 = sbr.rel (0) target = $region13
    $region12: #{tpu_custom_call.1} parent=1 // pred_region
      _
    $region13: #{tpu_custom_call.1} parent=1 // pred_fallthru
      _
    // Predicated region
    $region14: #{tpu_custom_call.1} parent=1 // pred_check
      _
    $region15: #{tpu_custom_call.1} parent=1 // pred_check_branch
      %18 = sbr.rel (0) target = $region17
    $region16: #{tpu_custom_call.1} parent=1 // pred_region
      _
    $region17: #{tpu_custom_call.1} parent=1 // pred_fallthru
      _
    // Predicated region
    $region18: #{tpu_custom_call.1} parent=1 // pred_check
      _
    $region19: #{tpu_custom_call.1} parent=1 // pred_check_branch
      %20 = sbr.rel (0) target = $region21
    $region20: #{tpu_custom_call.1} parent=1 // pred_region
      _
    $region21: #{tpu_custom_call.1} parent=1 // pred_fallthru
      _
    %v22 = vld [vmem:[%s0] sm:$0xf]
    %v23 = vld [vmem:[%s0 + $0x4] sm:$0xf]
    %v24 = vld [vmem:[%s0 + $0x8] sm:$0xf]
    %v25 = vld [vmem:[%s0 + $0xc] sm:$0xf]
    %v26 = vld [vmem:[%s1] sm:$0xff]
    %v27 = vld [vmem:[%s1 + $0x8] sm:$0xff]
    %v28 = vld [vmem:[%s2] sm:$0xff]
    %v29 = vld [vmem:[%s2 + $0x8] sm:$0xff]
    %31 = vset.pattern.permute.xlu0 0
    %32 = vperm.xlu0 %31, %v28
    %v33 = vpop.permute.xlu0 %32
    %36 = vset.pattern.permute.xlu0 0
    %37 = vperm.xlu0 %36, %v29
    %v38 = vpop.permute.xlu0 %37
    %v40 = vmul.f32 %v26, %v33
    %v41 = vmul.f32 %v27, %v38
    %42 = vset.pattern.permute.xlu0 1
    %43 = vperm.xlu0 %42, %v28
    %v44 = vpop.permute.xlu0 %43
    %46 = vset.pattern.permute.xlu0 1
    %47 = vperm.xlu0 %46, %v29
    %v48 = vpop.permute.xlu0 %47
    %v50 = vmul.f32 %v26, %v44
    %v51 = vmul.f32 %v27, %v48
    %54 = vrot.lane.b32.xlu0 %v50, 4
    %v55 = vpop.permute.xlu0 %54
    %56 = vrot.lane.b32.xlu0 %v51, 4
    %v57 = vpop.permute.xlu0 %56
    %vm60 = vcmask 31744
    %v61 = vsel %vm60, %v40, %v55
    %v62 = vsel %vm60, %v41, %v57
    %v63 = vpack.c.bf16 %v62, %v61
    %v68 = vunpack.c.l.b16 %v22
    %v69 = vunpack.c.l.b16 %v23
    %v70 = vunpack.c.l.b16 %v24
    %v71 = vunpack.c.l.b16 %v25
    %v72 = vpack.c.b16 %v69, %v68
    %v73 = vpack.c.b16 %v71, %v70
    %vm74 = vcmask 130048
    %v76 = vsel %vm74, %v72, 0
    %v79 = vsel %vm74, %v73, 0
    %81 = vmatpush.bf16.msra.mxu0 0
    %82 = vmatpush.bf16.msra.mxu0 0
    %83 = vmatpush.bf16.msra.mxu0 0
    %84 = vmatpush.bf16.msra.mxu0 0
    %85 = vmatpush.bf16.msra.mxu0 0
    %86 = vmatpush.bf16.msra.mxu0 0
    %87 = vmatpush.bf16.msra.mxu0 0
    %88 = vmatpush.bf16.msra.mxu0 %v63
    %89 = vmatmul.bf16.gmra.mxu0 %v76
    %v90 = vpop.f32.mrf.mxu0
    %v91 = vadd.f32 0.0, %v90
    %v92 = vpop.f32.mrf.mxu0
    %v93 = vadd.f32 0.0, %v92
    %94 = vmatmul.bf16.gmra.mxu0 %v79
    %v95 = vpop.f32.mrf.mxu0
    %v96 = vadd.f32 0.0, %v95
    %v97 = vpop.f32.mrf.mxu0
    %v98 = vadd.f32 0.0, %v97
    %99 = vdwg.mxu0
    %v100 = vmul.f32 %v91, %v33
    %v101 = vmul.f32 %v93, %v38
    %v102 = vmul.f32 %v96, %v44
    %v103 = vmul.f32 %v98, %v48
    %v104 = vsel %vm60, %v100, %v102
    %v105 = vsel %vm60, %v101, %v103
    %v106 = vpack.c.bf16 %v105, %v104
    %107 = vmatpush.bf16.msra.mxu0 0
    %108 = vmatpush.bf16.msra.mxu0 0
    %109 = vmatpush.bf16.msra.mxu0 0
    %110 = vmatpush.bf16.msra.mxu0 0
    %111 = vmatpush.bf16.msra.mxu0 0
    %112 = vmatpush.bf16.msra.mxu0 0
    %113 = vmatpush.bf16.msra.mxu0 0
    %114 = vmatpush.bf16.msra.mxu0 %v106
    %115 = vmatmul.bf16.gmra.mxu0 %v76
    %v116 = vpop.f32.mrf.mxu0
    %v117 = vadd.f32 0.0, %v116
    %v118 = vpop.f32.mrf.mxu0
    %v119 = vadd.f32 0.0, %v118
    %120 = vmatmul.bf16.gmra.mxu0 %v79
    %v121 = vpop.f32.mrf.mxu0
    %v122 = vadd.f32 0.0, %v121
    %v123 = vpop.f32.mrf.mxu0
    %v124 = vadd.f32 0.0, %v123
    %125 = vdwg.mxu0
    %v126 = vmul.f32 %v117, 2.0
    %v127 = vmul.f32 %v119, 2.0
    %v128 = vsub.f32 %v126, %v26
    %v129 = vsub.f32 %v127, %v27
    %v130 = vmul.f32 %v122, 2.0
    %v131 = vmul.f32 %v124, 2.0
    %134 = vrot.lane.b32.xlu0 %v26, 4
    %v135 = vpop.permute.xlu0 %134
    %136 = vrot.lane.b32.xlu0 %v27, 4
    %v137 = vpop.permute.xlu0 %136
    %v140 = vsub.f32 %v130, %v135
    %v141 = vsub.f32 %v131, %v137
    %144 = vrot.lane.b32.xlu0 %v91, 4
    %v145 = vpop.permute.xlu0 %144
    %146 = vrot.lane.b32.xlu0 %v93, 4
    %v147 = vpop.permute.xlu0 %146
    %152 = vrot.lane.b32.xlu0 %v128, 8
    %v153 = vpop.permute.xlu0 %152
    %154 = vrot.lane.b32.xlu0 %v129, 8
    %v155 = vpop.permute.xlu0 %154
    %160 = vrot.lane.b32.xlu0 %v96, 8
    %v161 = vpop.permute.xlu0 %160
    %162 = vrot.lane.b32.xlu0 %v98, 8
    %v163 = vpop.permute.xlu0 %162
    %168 = vrot.lane.b32.xlu0 %v140, 12
    %v169 = vpop.permute.xlu0 %168
    %170 = vrot.lane.b32.xlu0 %v141, 12
    %v171 = vpop.permute.xlu0 %170
    %v174 = vsel %vm60, %v26, %v145
    %v175 = vsel %vm60, %v27, %v147
    %vm176 = vcmask 64512
    %v177 = vsel %vm176, %v174, %v153
    %v178 = vsel %vm176, %v175, %v155
    %vm179 = vcmask 97280
    %v180 = vsel %vm179, %v177, %v161
    %v181 = vsel %vm179, %v178, %v163
    %v182 = vsel %vm74, %v180, %v169
    %v183 = vsel %vm74, %v181, %v171
    %vm184 = vcmask 162816
    %v185 = vsel %vm184, %v182, 1.0
    %v186 = vsel %vm184, %v183, 1.0
    %v187 = vpack.c.bf16 %v186, %v185
    %v188 = vld [vmem:[%s3] sm:$0xf]
    %v189 = vld [vmem:[%s3 + $0x4] sm:$0xf]
    %v190 = vld [vmem:[%s3 + $0x8] sm:$0x7]
    %v194 = vunpack.c.l.b16 %v188
    %v195 = vunpack.c.l.b16 %v189
    %v196 = vunpack.c.l.b16 %v190
    %v197 = vpack.c.b16 %v195, %v194
    %v198 = vpack.c.b16 %v196, %v196
    %vm200 = vcmask 171008
    %v202 = vsel %vm200, %v187, 0
    %vm204 = vcmask 1041408
    %vm205 = vcmask 1042432
    %v206 = vsel %vm204, 4294967295, 65535
    %v207 = vsel %vm205, %v206, 0
    %v209 = vand.u32 %v198, %v207
    %211 = vmatpush.bf16.msra.mxu0 0
    %212 = vmatpush.bf16.msra.mxu0 0
    %213 = vmatpush.bf16.msra.mxu0 0
    %214 = vmatpush.bf16.msra.mxu0 0
    %215 = vmatpush.bf16.msra.mxu0 0
    %216 = vmatpush.bf16.msra.mxu0 0
    %217 = vmatpush.bf16.msra.mxu0 %v209
    %218 = vmatpush.bf16.msra.mxu0 %v197
    %219 = vmatmul.bf16.gmra.mxu0 %v202
    %v220 = vpop.f32.mrf.mxu0
    %v221 = vadd.f32 0.0, %v220
    %v222 = vpop.f32.mrf.mxu0
    %v223 = vadd.f32 0.0, %v222
    %224 = vdwg.mxu0
    %v225 = vxor.u32 %v221, 2147483648
    %v226 = vxor.u32 %v223, 2147483648
    %v227 = vmul.f32 %v225, 1.442695
    %v228 = vpow.pop %v227
    %v229 = vmul.f32 %v226, 1.442695
    %v230 = vpow.pop %v229
    %v231 = vadd.f32 %v228, 1.0
    %v232 = vadd.f32 %v230, 1.0
    %v233 = vrcp.pop %v231
    %v234 = vmul.f32 %v231, %v233
    %v235 = vsub.f32 1.0, %v234
    %v236 = vmul.f32 %v233, %v235
    %v237 = vadd.f32 %v233, %v236
    %vm238 = vweird.f32 %v231
    %vm239 = vweird.f32 %v233
    %vm240 = vmor %vm238, %vm239
    %v241 = vsel %vm240, %v233, %v237
    %v242 = vand.u32 2147483647, %v231
    %vm243 = vcmp.eq.f32.partialorder %v242, 8.507059e+37
    %v244 = vand.u32 %v231, 2147483648
    %v245 = vor.u32 1.1754944e-38, %v244
    %v246 = vsel %vm243, %v245, %v241
    %v247 = vmul.f32 1.0, %v246
    %v248 = vrcp.pop %v232
    %v249 = vmul.f32 %v232, %v248
    %v250 = vsub.f32 1.0, %v249
    %v251 = vmul.f32 %v248, %v250
    %v252 = vadd.f32 %v248, %v251
    %vm253 = vweird.f32 %v232
    %vm254 = vweird.f32 %v248
    %vm255 = vmor %vm253, %vm254
    %v256 = vsel %vm255, %v248, %v252
    %v257 = vand.u32 2147483647, %v232
    %vm258 = vcmp.eq.f32.partialorder %v257, 8.507059e+37
    %v259 = vand.u32 %v232, 2147483648
    %v260 = vor.u32 1.1754944e-38, %v259
    %v261 = vsel %vm258, %v260, %v256
    %v262 = vmul.f32 1.0, %v261
    %v263 = vtanh.pop %v221
    %v264 = vtanh.pop %v223
    %v265 = vsub.f32 1.0, %v247
    %v266 = vsub.f32 1.0, %v262
    %269 = vrot.lane.b32.xlu0 %v263, 64
    %v270 = vpop.permute.xlu0 %269
    %271 = vrot.lane.b32.xlu0 %v264, 64
    %v272 = vpop.permute.xlu0 %271
    %v275 = vmul.f32 %v265, %v270
    %v276 = vmul.f32 %v266, %v272
    %v277 = vmax.f32 %v275, 0.0
    %v278 = vmax.f32 %v276, 0.0
    %vm279 = vcmask 523264
    %v280 = vsel %vm279, %v277, 1.0
    %v281 = vsel %vm279, %v278, 1.0
    %v282 = vpack.c.bf16 %v281, %v280
    %v283 = vld [vmem:[%s4] sm:$0xf]
    %v284 = vld [vmem:[%s4 + $0x4] sm:$0xf]
    %v285 = vld [vmem:[%s4 + $0x8] sm:$0xf]
    %v286 = vld [vmem:[%s4 + $0xc] sm:$0xf]
    %v287 = vld [vmem:[%s4 + $0x10] sm:$0xf]
    %v288 = vld [vmem:[%s4 + $0x14] sm:$0xf]
    %v289 = vld [vmem:[%s4 + $0x18] sm:$0xf]
    %v290 = vld [vmem:[%s4 + $0x1c] sm:$0xf]
    %v291 = vld [vmem:[%s4 + $0x20] sm:$0x1]
    %v301 = vunpack.c.l.b16 %v283
    %v302 = vunpack.c.l.b16 %v284
    %v303 = vunpack.c.l.b16 %v285
    %v304 = vunpack.c.l.b16 %v286
    %v305 = vunpack.c.l.b16 %v287
    %v306 = vunpack.c.l.b16 %v288
    %v307 = vunpack.c.l.b16 %v289
    %v308 = vunpack.c.l.b16 %v290
    %v309 = vunpack.c.l.b16 %v291
    %v310 = vpack.c.b16 %v302, %v301
    %v311 = vpack.c.b16 %v304, %v303
    %v312 = vpack.c.b16 %v306, %v305
    %v313 = vpack.c.b16 %v308, %v307
    %v314 = vpack.c.b16 %v309, %v309
    %vm319 = vcmask 531456
    %v321 = vsel %vm319, %v282, 0
    %vm323 = vcmask 1040384
    %v324 = vsel 0, 4294967295, 65535
    %v325 = vsel %vm323, %v324, 0
    %v327 = vand.u32 %v314, %v325
    %329 = vmatpush.bf16.msra.mxu0 0
    %330 = vmatpush.bf16.msra.mxu0 0
    %331 = vmatpush.bf16.msra.mxu0 0
    %332 = vmatpush.bf16.msra.mxu0 %v327
    %333 = vmatpush.bf16.msra.mxu0 %v313
    %334 = vmatpush.bf16.msra.mxu0 %v312
    %335 = vmatpush.bf16.msra.mxu0 %v311
    %336 = vmatpush.bf16.msra.mxu0 %v310
    %337 = vmatmul.bf16.gmra.mxu0 %v321
    %v338 = vpop.f32.mrf.mxu0
    %v339 = vadd.f32 0.0, %v338
    %v340 = vpop.f32.mrf.mxu0
    %v341 = vadd.f32 0.0, %v340
    %342 = vdwg.mxu0
    %343 = vst [vmem:[#allocation2] sm:$0xff] %v339
    %344 = vst [vmem:[#allocation2 + $0x8] sm:$0xff] %v341
    // Predicated region
    $region22: #{tpu_custom_call.1} parent=1 // pred_check
      _
    $region23: #{tpu_custom_call.1} parent=1 // pred_check_branch
      %346 = sbr.rel (0) target = $region25
    $region24: #{tpu_custom_call.1} parent=1 // pred_region
      %348 = vsyncadd [#allocation3], 0
      %s349 = sshll.u32 [#allocation2], 4
      %s350 = int_to_ptr.vmem [resolvable:$true] %s349
      %s351 = sshll.u32 %s5, 4
      %s352 = int_to_ptr.hbm [resolvable:$true] %s351
      %357 = dma.vmem_to_hbm [thread:$0]  %s350, 256, %s352, [#allocation3], 128, 128, 8
    $region25: #{tpu_custom_call.1} parent=1 // pred_fallthru
      _
    // Predicated region
    $region26: #{tpu_custom_call.1} parent=1 // pred_check
      _
    $region27: #{tpu_custom_call.1} parent=1 // pred_check_branch
      %359 = sbr.rel (0) target = $region29
    $region28: #{tpu_custom_call.1} parent=1 // pred_region
      %361 = dma.done [#allocation3], 256
    $region29: #{tpu_custom_call.1} parent=1 // pred_fallthru
      _
    %362 = vsyncpa [#allocation3], 1

</llo_original>
